<compile_context>
chip_gen: v7x
topology: tpu7x:2x2x1
jax: 0.10.0
libtpu: 0.0.40
codegen_flags: <defaults>
</compile_context>

<pallas_src>
import numpy as np
import jax
import jax.numpy as jnp
from jax.experimental import pallas as pl
from jax.experimental.pallas import tpu as pltpu


def _round_up(x, m):
    return (x + m - 1) // m * m


def _divisors(n):
    ds = set()
    i = 1
    while i * i <= n:
        if n % i == 0:
            ds.add(i)
            ds.add(n // i)
        i += 1
    return sorted(ds)


# ----------------------------- Pallas kernel ------------------------------ #
def _attention_block_kernel(g_ref, x_ref, wg_ref, wx_ref, b_ref,
                            wpsi_ref, bpsi_ref, o_ref):
    # channels-major tiles: (C, TP) with the pixel axis lane-dense.
    g = g_ref[...]                         # (F_g, TP) bf16
    x = x_ref[...]                         # (F_l, TP) bf16

    # 1x1 conv + folded BN == channel matmul (bf16 MXU, f32 accumulate);
    # both branch biases were pre-summed at param-construction time.
    r = (jnp.dot(wg_ref[...], g, preferred_element_type=jnp.float32)
         + jnp.dot(wx_ref[...], x, preferred_element_type=jnp.float32)
         + b_ref[...])                     # (F_int, TP) f32 + (F_int, 1)
    r = jnp.maximum(r, 0.0)                # ReLU (f32)

    # psi path: (1, F_int) @ (F_int, TP) -> lane-dense (1, TP) row (f32).
    # TODO(synk): on v5e, if MXU-push-bound, replace this 1-row dot with a
    # VPU multiply + sublane (XLU) reduction over F_int.
    s = (jnp.dot(wpsi_ref[...], r, preferred_element_type=jnp.float32)
         + bpsi_ref[0])                    # scalar bias from SMEM
    psi = jax.nn.sigmoid(s)                # (1, TP) f32

    # Gate: sublane broadcast of psi over F_l channels; f32 math, bf16 store.
    o_ref[...] = (x.astype(jnp.float32) * psi).astype(o_ref.dtype)


# ------------------------------ tile planning ----------------------------- #
def _plan_tiling(hw_pad, n_batch, f_g, f_l, f_int, *, tile_p=None,
                 vmem_budget_bytes=20 * 1024 * 1024, min_grid_steps=4):
    """Pick the largest lane-aligned pixel tile that (a) divides the 128-padded
    pixel count, (b) stays inside a VMEM budget safe on every generation
    (v7x has only 64 MiB physical VMEM), and (c) leaves >= min_grid_steps grid
    steps when possible so both v7x TensorCores get work.  Returns
    (tile_p, vmem_limit_bytes) with the limit derived from the same estimate."""
    fg16 = _round_up(f_g, 16)    # bf16 sublane packing (16 rows / vreg)
    fl16 = _round_up(f_l, 16)
    fi8 = _round_up(f_int, 8)    # f32 sublane packing
    fi16 = _round_up(f_int, 16)

    # VMEM bytes that scale with the pixel-tile width.
    per_pixel = (2 * 2 * fg16          # g tile, bf16, double-buffered
                 + 2 * 2 * fl16        # x tile, bf16, double-buffered
                 + 2 * 2 * fl16        # out tile, bf16, double-buffered
                 + 4 * fi8             # relu(g1 + x1) intermediate, f32
                 + 4 * 8               # psi row (1 -> 8 sublanes), f32
                 + 4 * fl16)           # f32 gating temp before the bf16 cast
    # Fixed VMEM: (double-buffered) weight / bias blocks.
    fixed = (2 * 2 * fi16 * _round_up(f_g, 128)      # W_g, bf16
             + 2 * 2 * fi16 * _round_up(f_l, 128)    # W_x, bf16
             + 2 * 4 * fi8 * 128                     # b_g + b_x, f32 (F_int,1)
             + 2 * 4 * 8 * _round_up(f_int, 128))    # w_psi, f32 (1, F_int)

    if tile_p is None:
        cap = (vmem_budget_bytes - fixed) // max(per_pixel, 1)
        cap = max(128, cap // 128 * 128)

        # Megacore occupancy (v7x: 2 TCs): prefer >= min_grid_steps grid steps.
        steps_per_image = max(1, -(-min_grid_steps // max(n_batch, 1)))
        occ_cap = max(128, (hw_pad // steps_per_image) // 128 * 128)

        desired = max(128, min(cap, occ_cap))

        n128 = hw_pad // 128
        tile_p = 128
        for t in _divisors(n128):          # t = number of pixel tiles
            cand = hw_pad // t
            if cand <= desired:
                tile_p = cand
                break

    vmem_limit = fixed + per_pixel * tile_p + (4 << 20)   # + compiler headroom
    vmem_limit = int(min(max(vmem_limit, 16 << 20), 48 << 20))
    return tile_p, vmem_limit


# ------------------------------ pallas_call -------------------------------- #
def attention_block_pallas(g3, x3, wg, wx, b_sum, wpsi, bpsi, *,
                           tile_p, vmem_limit_bytes):
    """g3: (N, F_g, P) bf16, x3: (N, F_l, P) bf16, P a multiple of tile_p."""
    N, F_g, P = g3.shape
    _, F_l, _ = x3.shape
    F_int = wg.shape[0]
    assert P % tile_p == 0 and tile_p % 128 == 0
    grid = (N, P // tile_p)

    flops = int(N * P * (2 * F_int * (F_g + F_l + 1) + 3 * F_int + F_l + 1))
    bytes_accessed = int(2 * N * P * (F_g + 2 * F_l)          # bf16 activations
                         + 2 * F_int * (F_g + F_l)            # bf16 weights
                         + 4 * (F_int + F_int + 1))           # f32 biases/wpsi
    cost = pl.CostEstimate(flops=flops,
                           transcendentals=int(N * P),
                           bytes_accessed=bytes_accessed)

    return pl.pallas_call(
        _attention_block_kernel,
        out_shape=jax.ShapeDtypeStruct((N, F_l, P), jnp.bfloat16),
        grid_spec=pltpu.PrefetchScalarGridSpec(
            num_scalar_prefetch=0,
            grid=grid,
            in_specs=[
                pl.BlockSpec((None, F_g, tile_p), lambda n, p: (n, 0, p)),  # g
                pl.BlockSpec((None, F_l, tile_p), lambda n, p: (n, 0, p)),  # x
                pl.BlockSpec((F_int, F_g), lambda n, p: (0, 0)),   # W_g (folded, bf16)
                pl.BlockSpec((F_int, F_l), lambda n, p: (0, 0)),   # W_x (folded, bf16)
                pl.BlockSpec((F_int, 1),   lambda n, p: (0, 0)),   # b_g + b_x (f32)
                pl.BlockSpec((1, F_int),   lambda n, p: (0, 0)),   # w_psi (folded, f32)
                pl.BlockSpec(memory_space=pltpu.MemorySpace.SMEM),  # b_psi scalar
            ],
            out_specs=pl.BlockSpec((None, F_l, tile_p), lambda n, p: (n, 0, p)),
        ),
        compiler_params=pltpu.CompilerParams(
            dimension_semantics=("parallel", "parallel"),
            vmem_limit_bytes=int(vmem_limit_bytes)),
        cost_estimate=cost,
    )(g3, x3, wg, wx, b_sum, wpsi, bpsi)


# ------------------------- parameter construction ------------------------- #
def fold_conv_bn(w, b, gamma, beta, mean, var, eps=1e-5):
    """Fold Conv1x1(weight=w[out,in], bias=b) + BatchNorm(eval) into (W, bias)
    in CHANNELS-MAJOR form:  y = W @ x + bias[:, None]  with x of shape (in, P)."""
    scale = gamma / jnp.sqrt(var + eps)              # (out,)
    w_eff = w * scale[:, None]                       # (out, in)
    b_eff = (b - mean) * scale + beta                # (out,)
    return w_eff.astype(jnp.float32), b_eff.astype(jnp.float32)


def make_params(key, F_g, F_l, F_int):
    ks = jax.random.split(key, 9)
    # Conv weights (PyTorch layout [out, in] for 1x1 kernels) and biases.
    wg_conv = jax.random.normal(ks[0], (F_int, F_g)) * 0.2
    bg_conv = jax.random.normal(ks[1], (F_int,)) * 0.1
    wx_conv = jax.random.normal(ks[2], (F_int, F_l)) * 0.2
    bx_conv = jax.random.normal(ks[3], (F_int,)) * 0.1
    wp_conv = jax.random.normal(ks[4], (1, F_int)) * 0.2
    bp_conv = jax.random.normal(ks[5], (1,)) * 0.1
    # BatchNorm (eval-mode) params: gamma, beta, running_mean, running_var.
    bn = lambda k, c: (1.0 + 0.1 * jax.random.normal(jax.random.fold_in(k, 0), (c,)),
                       0.1 * jax.random.normal(jax.random.fold_in(k, 1), (c,)),
                       0.1 * jax.random.normal(jax.random.fold_in(k, 2), (c,)),
                       0.5 + jnp.abs(jax.random.normal(jax.random.fold_in(k, 3), (c,))))
    gg, bgb, mg, vg = bn(ks[6], F_int)
    gx, bxb, mx, vx = bn(ks[7], F_int)
    gp, bpb, mp, vp = bn(ks[8], 1)

    wg, bg = fold_conv_bn(wg_conv, bg_conv, gg, bgb, mg, vg)   # (F_int, F_g)
    wx, bx = fold_conv_bn(wx_conv, bx_conv, gx, bxb, mx, vx)   # (F_int, F_l)
    wp, bp = fold_conv_bn(wp_conv, bp_conv, gp, bpb, mp, vp)   # (1, F_int)

    b_sum = (bg + bx).reshape(F_int, 1)                        # fused branch biases, f32
    return (wg.astype(jnp.bfloat16),            # MXU-native weights
            wx.astype(jnp.bfloat16),
            b_sum,                               # f32
            wp.reshape(1, F_int),                # f32 (psi row dot stays f32)
            bp.reshape(1,))                      # f32 scalar (lives in SMEM)


# ------------------------------- wrapper ---------------------------------- #
def attention_block(g_nchw, x_nchw, params, tile_p=None):
    wg, wx, b_sum, wpsi, bpsi = params
    N, Cg, H, W = g_nchw.shape
    _, Cx, _, _ = x_nchw.shape
    F_int = wg.shape[0]
    HW = H * W
    HW_pad = _round_up(HW, 128)                 # lane requirement only

    # NCHW -> (N, C, P): a free reshape, no transpose, channels stay major.
    # bf16 activations halve HBM traffic of this bandwidth-bound op.
    g3 = g_nchw.reshape(N, Cg, HW).astype(jnp.bfloat16)
    x3 = x_nchw.reshape(N, Cx, HW).astype(jnp.bfloat16)
    if HW_pad != HW:                            # <=127 pixels of padding, <6% worst case
        pad = HW_pad - HW
        g3 = jnp.pad(g3, ((0, 0), (0, 0), (0, pad)))
        x3 = jnp.pad(x3, ((0, 0), (0, 0), (0, pad)))

    tile_p, vmem_limit = _plan_tiling(HW_pad, N, Cg, Cx, F_int, tile_p=tile_p)

    out3 = attention_block_pallas(g3, x3, wg, wx, b_sum, wpsi, bpsi,
                                  tile_p=tile_p, vmem_limit_bytes=vmem_limit)
    if HW_pad != HW:
        out3 = out3[:, :, :HW]
    return out3.reshape(N, Cx, H, W)            # bf16 output


def attention_block_ref(g_nchw, x_nchw, params):
    """Pure-JAX f32 reference (same folded-BN semantics, same bf16-quantized
    activations/weights so the comparison isolates kernel correctness)."""
    wg, wx, b_sum, wpsi, bpsi = params
    N, Cg, H, W = g_nchw.shape
    _, Cx, _, _ = x_nchw.shape
    gf = g_nchw.reshape(N, Cg, H * W).astype(jnp.bfloat16).astype(jnp.float32)
    xf = x_nchw.reshape(N, Cx, H * W).astype(jnp.bfloat16).astype(jnp.float32)
    wg32 = wg.astype(jnp.float32)
    wx32 = wx.astype(jnp.float32)
    r = jnp.maximum(jnp.einsum('oc,ncp->nop', wg32, gf)
                    + jnp.einsum('oc,ncp->nop', wx32, xf)
                    + b_sum[None], 0.0)
    s = jnp.einsum('of,nfp->nop', wpsi, r) + bpsi.reshape(1, 1, 1)
    psi = jax.nn.sigmoid(s)
    return (xf * psi).reshape(N, Cx, H, W)


if __name__ == "__main__":
    # Small shapes consistent with the module: g and x are NCHW feature maps.
    N, F_g, F_l, F_int, H, W = 2, 4, 4, 8, 16, 16

    key = jax.random.PRNGKey(0)
    kg, kx, kp = jax.random.split(key, 3)
    g = jax.random.normal(kg, (N, F_g, H, W), dtype=jnp.float32)
    x = jax.random.normal(kx, (N, F_l, H, W), dtype=jnp.float32)
    params = make_params(kp, F_g, F_l, F_int)

    out = attention_block(g, x, params)
    out = jax.block_until_ready(out)

    ref = attention_block_ref(g, x, params)
    # Kernel output is bf16 (bandwidth optimization); compare with bf16 tolerance.
    np.testing.assert_allclose(np.asarray(out, dtype=np.float32),
                               np.asarray(ref), rtol=1e-2, atol=1e-2)
    print("KERNEL_OK")
</pallas_src>

<mosaic_0001>
module attributes {stable_mosaic.version = 11 : i64} {
  func.func @_attention_block_kernel(%arg0: i32, %arg1: i32, %arg2: memref<1x4x128xbf16, #tpu.memory_space<vmem>>, %arg3: memref<1x4x128xbf16, #tpu.memory_space<vmem>>, %arg4: memref<8x4xbf16, #tpu.memory_space<vmem>>, %arg5: memref<8x4xbf16, #tpu.memory_space<vmem>>, %arg6: memref<8x1xf32, #tpu.memory_space<vmem>>, %arg7: memref<1x8xf32, #tpu.memory_space<vmem>>, %arg8: memref<1xf32, #tpu.memory_space<smem>>, %arg9: memref<1x4x128xbf16, #tpu.memory_space<vmem>>) attributes {dimension_semantics = [#tpu.dimension_semantics<parallel>, #tpu.dimension_semantics<parallel>], iteration_bounds = array<i64: 2, 2>, scalar_prefetch = 0 : i64, scratch_operands = 0 : i64, tpu.core_type = #tpu.core_type<tc>, window_params = [{transform_indices = @transform_0, window_bounds = array<i64: 1, 4, 128>}, {transform_indices = @transform_1, window_bounds = array<i64: 1, 4, 128>}, {pipeline_mode = #tpu.pipeline_mode<synchronous>, transform_indices = @transform_2, window_bounds = array<i64: 8, 4>}, {pipeline_mode = #tpu.pipeline_mode<synchronous>, transform_indices = @transform_3, window_bounds = array<i64: 8, 4>}, {pipeline_mode = #tpu.pipeline_mode<synchronous>, transform_indices = @transform_4, window_bounds = array<i64: 8, 1>}, {pipeline_mode = #tpu.pipeline_mode<synchronous>, transform_indices = @transform_5, window_bounds = array<i64: 1, 8>}, {transform_indices = @transform_6, window_bounds = array<i64: 1>}, {transform_indices = @transform_7, window_bounds = array<i64: 1, 4, 128>}]} {
    %c0 = arith.constant 0 : index
    %c0_0 = arith.constant 0 : index
    %c0_1 = arith.constant 0 : index
    %0 = vector.load %arg2[%c0, %c0_0, %c0_1] : memref<1x4x128xbf16, #tpu.memory_space<vmem>>, vector<1x4x128xbf16>
    %1 = vector.shape_cast %0 : vector<1x4x128xbf16> to vector<4x128xbf16>
    %c0_2 = arith.constant 0 : index
    %c0_3 = arith.constant 0 : index
    %c0_4 = arith.constant 0 : index
    %2 = vector.load %arg3[%c0_2, %c0_3, %c0_4] : memref<1x4x128xbf16, #tpu.memory_space<vmem>>, vector<1x4x128xbf16>
    %3 = vector.shape_cast %2 : vector<1x4x128xbf16> to vector<4x128xbf16>
    %c0_5 = arith.constant 0 : index
    %c0_6 = arith.constant 0 : index
    %4 = vector.load %arg4[%c0_5, %c0_6] : memref<8x4xbf16, #tpu.memory_space<vmem>>, vector<8x4xbf16>
    %cst = arith.constant dense<0.000000e+00> : vector<8x128xf32>
    %5 = tpu.matmul %4, %1, %cst {dimension_numbers = #tpu.dot_dimension_numbers<[1], [0], [0], [1], [0, 0, 1, 1], [], []>} : vector<8x4xbf16>, vector<4x128xbf16>, vector<8x128xf32> -> vector<8x128xf32>
    %c0_7 = arith.constant 0 : index
    %c0_8 = arith.constant 0 : index
    %6 = vector.load %arg5[%c0_7, %c0_8] : memref<8x4xbf16, #tpu.memory_space<vmem>>, vector<8x4xbf16>
    %cst_9 = arith.constant dense<0.000000e+00> : vector<8x128xf32>
    %7 = tpu.matmul %6, %3, %cst_9 {dimension_numbers = #tpu.dot_dimension_numbers<[1], [0], [0], [1], [0, 0, 1, 1], [], []>} : vector<8x4xbf16>, vector<4x128xbf16>, vector<8x128xf32> -> vector<8x128xf32>
    %8 = arith.addf %5, %7 : vector<8x128xf32>
    %c0_10 = arith.constant 0 : index
    %c0_11 = arith.constant 0 : index
    %9 = vector.load %arg6[%c0_10, %c0_11] : memref<8x1xf32, #tpu.memory_space<vmem>>, vector<8x1xf32>
    %10 = vector.broadcast %9 : vector<8x1xf32> to vector<8x128xf32>
    %11 = arith.addf %8, %10 : vector<8x128xf32>
    %cst_12 = arith.constant 0.000000e+00 : f32
    %12 = vector.broadcast %cst_12 : f32 to vector<8x128xf32>
    %13 = arith.maximumf %11, %12 : vector<8x128xf32>
    %c0_13 = arith.constant 0 : index
    %c0_14 = arith.constant 0 : index
    %14 = vector.load %arg7[%c0_13, %c0_14] : memref<1x8xf32, #tpu.memory_space<vmem>>, vector<1x8xf32>
    %cst_15 = arith.constant dense<0.000000e+00> : vector<1x128xf32>
    %15 = tpu.matmul %14, %13, %cst_15 {dimension_numbers = #tpu.dot_dimension_numbers<[1], [0], [0], [1], [0, 0, 1, 1], [], []>} : vector<1x8xf32>, vector<8x128xf32>, vector<1x128xf32> -> vector<1x128xf32>
    %c0_16 = arith.constant 0 : index
    %16 = memref.load %arg8[%c0_16] : memref<1xf32, #tpu.memory_space<smem>>
    %17 = vector.broadcast %16 : f32 to vector<1x128xf32>
    %18 = arith.addf %15, %17 : vector<1x128xf32>
    %19 = arith.negf %18 : vector<1x128xf32>
    %20 = math.exp %19 : vector<1x128xf32>
    %cst_17 = arith.constant 1.000000e+00 : f32
    %21 = vector.broadcast %cst_17 : f32 to vector<1x128xf32>
    %22 = arith.addf %21, %20 : vector<1x128xf32>
    %23 = arith.divf %21, %22 : vector<1x128xf32>
    %24 = arith.extf %3 : vector<4x128xbf16> to vector<4x128xf32>
    %25 = vector.broadcast %23 : vector<1x128xf32> to vector<4x128xf32>
    %26 = arith.mulf %24, %25 : vector<4x128xf32>
    %27 = arith.truncf %26 : vector<4x128xf32> to vector<4x128xbf16>
    %c0_18 = arith.constant 0 : index
    %c0_19 = arith.constant 0 : index
    %c0_20 = arith.constant 0 : index
    %28 = vector.load %arg9[%c0_18, %c0_19, %c0_20] : memref<1x4x128xbf16, #tpu.memory_space<vmem>>, vector<1x4x128xbf16>
    %29 = vector.shape_cast %28 : vector<1x4x128xbf16> to vector<4x128xbf16>
    %30 = vector.shape_cast %27 : vector<4x128xbf16> to vector<1x4x128xbf16>
    tpu.vector_store %arg9[%c0_18, %c0_19, %c0_20], %30 {strides = array<i32>} : memref<1x4x128xbf16, #tpu.memory_space<vmem>>, vector<1x4x128xbf16>,
    return
  }
  func.func @transform_0(%arg0: i32, %arg1: i32) -> (i32, i32, i32) {
    %c0_i32 = arith.constant 0 : i32
    %c0_i32_0 = arith.constant 0 : i32
    return %arg0, %c0_i32, %arg1 : i32, i32, i32
  }
  func.func @transform_1(%arg0: i32, %arg1: i32) -> (i32, i32, i32) {
    %c0_i32 = arith.constant 0 : i32
    %c0_i32_0 = arith.constant 0 : i32
    return %arg0, %c0_i32, %arg1 : i32, i32, i32
  }
  func.func @transform_2(%arg0: i32, %arg1: i32) -> (i32, i32) {
    %c0_i32 = arith.constant 0 : i32
    %c0_i32_0 = arith.constant 0 : i32
    %c0_i32_1 = arith.constant 0 : i32
    return %c0_i32, %c0_i32_0 : i32, i32
  }
  func.func @transform_3(%arg0: i32, %arg1: i32) -> (i32, i32) {
    %c0_i32 = arith.constant 0 : i32
    %c0_i32_0 = arith.constant 0 : i32
    %c0_i32_1 = arith.constant 0 : i32
    return %c0_i32, %c0_i32_0 : i32, i32
  }
  func.func @transform_4(%arg0: i32, %arg1: i32) -> (i32, i32) {
    %c0_i32 = arith.constant 0 : i32
    %c0_i32_0 = arith.constant 0 : i32
    %c0_i32_1 = arith.constant 0 : i32
    return %c0_i32, %c0_i32_0 : i32, i32
  }
  func.func @transform_5(%arg0: i32, %arg1: i32) -> (i32, i32) {
    %c0_i32 = arith.constant 0 : i32
    %c0_i32_0 = arith.constant 0 : i32
    %c0_i32_1 = arith.constant 0 : i32
    return %c0_i32, %c0_i32_0 : i32, i32
  }
  func.func @transform_6(%arg0: i32, %arg1: i32) -> i32 {
    %c0_i32 = arith.constant 0 : i32
    %c0_i32_0 = arith.constant 0 : i32
    return %c0_i32 : i32
  }
  func.func @transform_7(%arg0: i32, %arg1: i32) -> (i32, i32, i32) {
    %c0_i32 = arith.constant 0 : i32
    %c0_i32_0 = arith.constant 0 : i32
    return %arg0, %c0_i32, %arg1 : i32, i32, i32
  }
}

</mosaic_0001>

<llo_original>
// kernel: tpu_custom_call.1
$region0: #{tpu_custom_call.1}
  #allocation0 [shape = 'u32[]', space=smem, size = 0x4, offset = 0x4, fixed_abs, tag = 'smem constant byte address 0x4 - core index']
  #allocation1 [shape = 'u32[144,128]{1,0:T(1,128)}', space=vmem, size = 0x12000, scoped, tag = 'internal scratch']
  #allocation2 [shape = 'f32[1]{0:T(128)S(6)}', space=smem, size = 0x200, scoped, tag = 'scoped memory for tpu_custom_call.1']
  %s0 = inlined_call_operand.vmem [shape: bf16[2,4,256], index: 0, kind: input, shape index: {}]
  %s1 = inlined_call_operand.vmem [shape: bf16[2,4,256], index: 1, kind: input, shape index: {}]
  %s2 = inlined_call_operand.vmem [shape: bf16[8,4], index: 2, kind: input, shape index: {}]
  %s3 = inlined_call_operand.vmem [shape: bf16[8,4], index: 3, kind: input, shape index: {}]
  %s4 = inlined_call_operand.vmem [shape: f32[8,1], index: 4, kind: input, shape index: {}]
  %s5 = inlined_call_operand.vmem [shape: f32[1,8], index: 5, kind: input, shape index: {}]
  %s6 = inlined_call_operand.<no memory space> [shape: f32[1], index: 6, kind: input, shape index: {}]
  %s7 = inlined_call_operand.hbm [shape: bf16[2,4,256], index: 7, kind: output, shape index: {}]
  %s8 = sld [smem:[#allocation0]]
  $region61: #{tpu_custom_call.1} parent=0
    _
  %s10 = ssub.s32 1, %s8
  %s11 = scalar_select 0, %s10, %s8
  %12 = sst [smem:[#allocation2]] %s6
  $region1: #{tpu_custom_call.1} parent=0
    #allocation3 [shape = 'u8[2048]{0}', space=vmem, size = 0x800, scoped, tag = 'output window, operand 0']
    #allocation4 [shape = 's32[2]{0}', space=sflag, size = 0x8, scoped, tag = 'scoped memory for tpu_custom_call.1']
    %13 = vsyncpa [#allocation4], 0
    %s14 = scalar_lea.sflag [#allocation4], 1
    %15 = vsyncpa %s14, 0
    loop: start=0, step=1, limit=6
    $region2: #{tpu_custom_call.1} parent=1 // loop_pre_header
      _
    $region3: #{tpu_custom_call.1} parent=1 // loop_header
      %s17 = sphi 0, %s21
      %p18 = scmp.ge.s32.totalorder %s17, 6
      %s24 = sphi 0, %s36
      %s25 = sphi 0, %s32
      %s26 = sphi 0, %s24
      %s27 = sphi 0, %s25
      %s28 = sphi 0, %s26
      %s29 = sphi 0, %s27
      %s41 = sphi 0, %s43
      %s44 = sphi 0, %s41
      %s45 = sphi 0, %s44
      %s61 = sphi 0, %s45
      %s69 = sphi 0, %s71
      %s72 = sphi 0, %s69
      %s73 = sphi 0, %s72
      %s89 = sphi 0, %s73
      %s93 = sphi 0, %s93
      %s95 = sphi 0, %s93
      %s96 = sphi 0, %s95
      %s110 = sphi 0, %s96
      %s114 = sphi 0, %s114
      %s116 = sphi 0, %s114
      %s117 = sphi 0, %s116
      %s131 = sphi 0, %s117
      %s135 = sphi 0, %s135
      %s137 = sphi 0, %s135
      %s138 = sphi 0, %s137
      %s152 = sphi 0, %s138
      %s156 = sphi 0, %s156
      %s158 = sphi 0, %s156
      %s159 = sphi 0, %s158
      %s173 = sphi 0, %s159
      %s177 = sphi 0, %s177
      %s179 = sphi 0, %s177
      %s180 = sphi 0, %s179
      %s194 = sphi 0, %s180
      %s202 = sphi 0, %s204
      %s205 = sphi 0, %s202
      %s206 = sphi 0, %s205
      %s222 = sphi 0, %s206
    $region4: #{tpu_custom_call.1} parent=1 // loop_header_branch
      %20 = sbr.rel (%p18) target = $region8
    $region5: #{tpu_custom_call.1} parent=1 // loop_body
      %s22 = ssub.s32 %s17, 1
      %s23 = ssub.s32 %s17, 2
      %s30 = sadd.s32 1, %s25
      %p31 = scmp.ge.s32.totalorder %s30, 2
      %s32 = scalar_select %p31, 0, %s30
      %s33 = sadd.s32 1, %s24
      %s34 = scalar_select %p31, %s33, %s24
      %p35 = scmp.ge.s32.totalorder %s34, 2
      %s36 = scalar_select %p35, 0, %s34
      %s37 = ssub.s32 %s24, %s36
      %s38 = ssub.s32 %s25, %s32
      %s39 = sor.u32 %s37, %s38
      %p40 = scmp.eq.s32.totalorder %s39, 0
      %s42 = sadd.s32 %s41, 1
      %s43 = scalar_select %p40, %s41, %s42
      %p46 = pneg %p40
      %p47 = scmp.eq.s32.totalorder %s17, 3
      %p48 = por %p46, %p47
      %p49 = scmp.ne.s32.totalorder %s41, %s44
      %p50 = scmp.eq.s32.totalorder %s17, 0
      %p51 = por %p49, %p50
      %p52 = scmp.ne.s32.totalorder %s41, %s44
      %p53 = scmp.eq.s32.totalorder %s22, 3
      %p54 = por %p52, %p53
      %p55 = scmp.ne.s32.totalorder %s44, %s45
      %p56 = scmp.eq.s32.totalorder %s22, 0
      %p57 = por %p55, %p56
      %p58 = scmp.ne.s32.totalorder %s44, %s45
      %p59 = scmp.eq.s32.totalorder %s23, 3
      %p60 = por %p58, %p59
      %p62 = scmp.ne.s32.totalorder %s45, %s61
      %p63 = scmp.eq.s32.totalorder %s23, 0
      %p64 = por %p62, %p63
      %s65 = ssub.s32 %s24, %s36
      %s66 = ssub.s32 %s25, %s32
      %s67 = sor.u32 %s65, %s66
      %p68 = scmp.eq.s32.totalorder %s67, 0
      %s70 = sadd.s32 %s69, 1
      %s71 = scalar_select %p68, %s69, %s70
      %p74 = pneg %p68
      %p75 = scmp.eq.s32.totalorder %s17, 3
      %p76 = por %p74, %p75
      %p77 = scmp.ne.s32.totalorder %s69, %s72
      %p78 = scmp.eq.s32.totalorder %s17, 0
      %p79 = por %p77, %p78
      %p80 = scmp.ne.s32.totalorder %s69, %s72
      %p81 = scmp.eq.s32.totalorder %s22, 3
      %p82 = por %p80, %p81
      %p83 = scmp.ne.s32.totalorder %s72, %s73
      %p84 = scmp.eq.s32.totalorder %s22, 0
      %p85 = por %p83, %p84
      %p86 = scmp.ne.s32.totalorder %s72, %s73
      %p87 = scmp.eq.s32.totalorder %s23, 3
      %p88 = por %p86, %p87
      %p90 = scmp.ne.s32.totalorder %s73, %s89
      %p91 = scmp.eq.s32.totalorder %s23, 0
      %p92 = por %p90, %p91
      %s94 = sadd.s32 %s93, 1
      %p97 = scmp.eq.s32.totalorder %s17, 3
      %p98 = scmp.ne.s32.totalorder %s93, %s95
      %p99 = scmp.eq.s32.totalorder %s17, 0
      %p100 = por %p98, %p99
      %p101 = scmp.ne.s32.totalorder %s93, %s95
      %p102 = scmp.eq.s32.totalorder %s22, 3
      %p103 = por %p101, %p102
      %p104 = scmp.ne.s32.totalorder %s95, %s96
      %p105 = scmp.eq.s32.totalorder %s22, 0
      %p106 = por %p104, %p105
      %p107 = scmp.ne.s32.totalorder %s95, %s96
      %p108 = scmp.eq.s32.totalorder %s23, 3
      %p109 = por %p107, %p108
      %p111 = scmp.ne.s32.totalorder %s96, %s110
      %p112 = scmp.eq.s32.totalorder %s23, 0
      %p113 = por %p111, %p112
      %s115 = sadd.s32 %s114, 1
      %p118 = scmp.eq.s32.totalorder %s17, 3
      %p119 = scmp.ne.s32.totalorder %s114, %s116
      %p120 = scmp.eq.s32.totalorder %s17, 0
      %p121 = por %p119, %p120
      %p122 = scmp.ne.s32.totalorder %s114, %s116
      %p123 = scmp.eq.s32.totalorder %s22, 3
      %p124 = por %p122, %p123
      %p125 = scmp.ne.s32.totalorder %s116, %s117
      %p126 = scmp.eq.s32.totalorder %s22, 0
      %p127 = por %p125, %p126
      %p128 = scmp.ne.s32.totalorder %s116, %s117
      %p129 = scmp.eq.s32.totalorder %s23, 3
      %p130 = por %p128, %p129
      %p132 = scmp.ne.s32.totalorder %s117, %s131
      %p133 = scmp.eq.s32.totalorder %s23, 0
      %p134 = por %p132, %p133
      %s136 = sadd.s32 %s135, 1
      %p139 = scmp.eq.s32.totalorder %s17, 3
      %p140 = scmp.ne.s32.totalorder %s135, %s137
      %p141 = scmp.eq.s32.totalorder %s17, 0
      %p142 = por %p140, %p141
      %p143 = scmp.ne.s32.totalorder %s135, %s137
      %p144 = scmp.eq.s32.totalorder %s22, 3
      %p145 = por %p143, %p144
      %p146 = scmp.ne.s32.totalorder %s137, %s138
      %p147 = scmp.eq.s32.totalorder %s22, 0
      %p148 = por %p146, %p147
      %p149 = scmp.ne.s32.totalorder %s137, %s138
      %p150 = scmp.eq.s32.totalorder %s23, 3
      %p151 = por %p149, %p150
      %p153 = scmp.ne.s32.totalorder %s138, %s152
      %p154 = scmp.eq.s32.totalorder %s23, 0
      %p155 = por %p153, %p154
      %s157 = sadd.s32 %s156, 1
      %p160 = scmp.eq.s32.totalorder %s17, 3
      %p161 = scmp.ne.s32.totalorder %s156, %s158
      %p162 = scmp.eq.s32.totalorder %s17, 0
      %p163 = por %p161, %p162
      %p164 = scmp.ne.s32.totalorder %s156, %s158
      %p165 = scmp.eq.s32.totalorder %s22, 3
      %p166 = por %p164, %p165
      %p167 = scmp.ne.s32.totalorder %s158, %s159
      %p168 = scmp.eq.s32.totalorder %s22, 0
      %p169 = por %p167, %p168
      %p170 = scmp.ne.s32.totalorder %s158, %s159
      %p171 = scmp.eq.s32.totalorder %s23, 3
      %p172 = por %p170, %p171
      %p174 = scmp.ne.s32.totalorder %s159, %s173
      %p175 = scmp.eq.s32.totalorder %s23, 0
      %p176 = por %p174, %p175
      %s178 = sadd.s32 %s177, 1
      %p181 = scmp.eq.s32.totalorder %s17, 3
      %p182 = scmp.ne.s32.totalorder %s177, %s179
      %p183 = scmp.eq.s32.totalorder %s17, 0
      %p184 = por %p182, %p183
      %p185 = scmp.ne.s32.totalorder %s177, %s179
      %p186 = scmp.eq.s32.totalorder %s22, 3
      %p187 = por %p185, %p186
      %p188 = scmp.ne.s32.totalorder %s179, %s180
      %p189 = scmp.eq.s32.totalorder %s22, 0
      %p190 = por %p188, %p189
      %p191 = scmp.ne.s32.totalorder %s179, %s180
      %p192 = scmp.eq.s32.totalorder %s23, 3
      %p193 = por %p191, %p192
      %p195 = scmp.ne.s32.totalorder %s180, %s194
      %p196 = scmp.eq.s32.totalorder %s23, 0
      %p197 = por %p195, %p196
      %s198 = ssub.s32 %s24, %s36
      %s199 = ssub.s32 %s25, %s32
      %s200 = sor.u32 %s198, %s199
      %p201 = scmp.eq.s32.totalorder %s200, 0
      %s203 = sadd.s32 %s202, 1
      %s204 = scalar_select %p201, %s202, %s203
      %p207 = pneg %p201
      %p208 = scmp.eq.s32.totalorder %s17, 3
      %p209 = por %p207, %p208
      %p210 = scmp.ne.s32.totalorder %s202, %s205
      %p211 = scmp.eq.s32.totalorder %s17, 0
      %p212 = por %p210, %p211
      %p213 = scmp.ne.s32.totalorder %s202, %s205
      %p214 = scmp.eq.s32.totalorder %s22, 3
      %p215 = por %p213, %p214
      %p216 = scmp.ne.s32.totalorder %s205, %s206
      %p217 = scmp.eq.s32.totalorder %s22, 0
      %p218 = por %p216, %p217
      %p219 = scmp.ne.s32.totalorder %s205, %s206
      %p220 = scmp.eq.s32.totalorder %s23, 3
      %p221 = por %p219, %p220
      %p223 = scmp.ne.s32.totalorder %s206, %s222
      %p224 = scmp.eq.s32.totalorder %s23, 0
      %p225 = por %p223, %p224
      %p226 = scmp.le.s32.totalorder 1, %s17
      %p227 = scmp.lt.s32.totalorder %s17, 5
      %p228 = pnand %p226, %p227
      %p229 = pneg %p228
      // Predicated region
      $region9: #{tpu_custom_call.1} parent=5 // pred_check
        _
      $region10: #{tpu_custom_call.1} parent=5 // pred_check_branch
        %231 = sbr.rel (%p228) target = $region12
      $region11: #{tpu_custom_call.1} parent=5 // pred_region
        %s232 = ssub.s32 %s17, 1
        // Predicated region
        $region13: #{tpu_custom_call.1} parent=11 // pred_check
          %p233 = pneg %p106
        $region14: #{tpu_custom_call.1} parent=11 // pred_check_branch
          %235 = sbr.rel (%p233) target = $region16
        $region15: #{tpu_custom_call.1} parent=11 // pred_region
          _
        $region16: #{tpu_custom_call.1} parent=11 // pred_fallthru
          _
        // Predicated region
        $region17: #{tpu_custom_call.1} parent=11 // pred_check
          %p236 = pneg %p127
        $region18: #{tpu_custom_call.1} parent=11 // pred_check_branch
          %238 = sbr.rel (%p236) target = $region20
        $region19: #{tpu_custom_call.1} parent=11 // pred_region
          _
        $region20: #{tpu_custom_call.1} parent=11 // pred_fallthru
          _
        // Predicated region
        $region21: #{tpu_custom_call.1} parent=11 // pred_check
          %p239 = pneg %p148
        $region22: #{tpu_custom_call.1} parent=11 // pred_check_branch
          %241 = sbr.rel (%p239) target = $region24
        $region23: #{tpu_custom_call.1} parent=11 // pred_region
          _
        $region24: #{tpu_custom_call.1} parent=11 // pred_fallthru
          _
        // Predicated region
        $region25: #{tpu_custom_call.1} parent=11 // pred_check
          %p242 = pneg %p169
        $region26: #{tpu_custom_call.1} parent=11 // pred_check_branch
          %244 = sbr.rel (%p242) target = $region28
        $region27: #{tpu_custom_call.1} parent=11 // pred_region
          _
        $region28: #{tpu_custom_call.1} parent=11 // pred_fallthru
          _
        // Predicated region
        $region29: #{tpu_custom_call.1} parent=11 // pred_check
          %p245 = pneg %p190
        $region30: #{tpu_custom_call.1} parent=11 // pred_check_branch
          %247 = sbr.rel (%p245) target = $region32
        $region31: #{tpu_custom_call.1} parent=11 // pred_region
          _
        $region32: #{tpu_custom_call.1} parent=11 // pred_fallthru
          _
      $region12: #{tpu_custom_call.1} parent=5 // pred_fallthru
        _
      %p248 = scmp.lt.s32.totalorder %s17, 4
      // Predicated region
      $region33: #{tpu_custom_call.1} parent=5 // pred_check
        %p249 = pneg %p248
      $region34: #{tpu_custom_call.1} parent=5 // pred_check_branch
        %251 = sbr.rel (%p249) target = $region36
      $region35: #{tpu_custom_call.1} parent=5 // pred_region
        // Predicated region
        $region37: #{tpu_custom_call.1} parent=35 // pred_check
          %p252 = pneg %p51
        $region38: #{tpu_custom_call.1} parent=35 // pred_check_branch
          %254 = sbr.rel (%p252) target = $region40
        $region39: #{tpu_custom_call.1} parent=35 // pred_region
          %p255 = scmp.lt.s32.totalorder %s24, 1
          %s256 = scalar_select %p255, %s24, 1
          %p257 = scmp.lt.s32.totalorder %s25, 1
          %s258 = scalar_select %p257, %s25, 1
          %s259 = smul.addr %s256, 2
          %s260 = sadd.s32 %s258, %s259
          %s261 = smul.addr %s260, 2
          %s262 = scalar_lea.vmem %s0, %s261
        $region40: #{tpu_custom_call.1} parent=35 // pred_fallthru
          _
        // Predicated region
        $region41: #{tpu_custom_call.1} parent=35 // pred_check
          %p263 = pneg %p79
        $region42: #{tpu_custom_call.1} parent=35 // pred_check_branch
          %265 = sbr.rel (%p263) target = $region44
        $region43: #{tpu_custom_call.1} parent=35 // pred_region
          %p266 = scmp.lt.s32.totalorder %s24, 1
          %s267 = scalar_select %p266, %s24, 1
          %p268 = scmp.lt.s32.totalorder %s25, 1
          %s269 = scalar_select %p268, %s25, 1
          %s270 = smul.addr %s267, 2
          %s271 = sadd.s32 %s269, %s270
          %s272 = smul.addr %s271, 2
          %s273 = scalar_lea.vmem %s1, %s272
        $region44: #{tpu_custom_call.1} parent=35 // pred_fallthru
          _
      $region36: #{tpu_custom_call.1} parent=5 // pred_fallthru
        _
      %p274 = scmp.le.s32.totalorder 1, %s17
      %p275 = scmp.lt.s32.totalorder %s17, 5
      %p276 = pnand %p274, %p275
      %p277 = pneg %p276
      // Predicated region
      $region45: #{tpu_custom_call.1} parent=5 // pred_check
        _
      $region46: #{tpu_custom_call.1} parent=5 // pred_check_branch
        %279 = sbr.rel (%p276) target = $region48
      $region47: #{tpu_custom_call.1} parent=5 // pred_region
        %s280 = ssub.s32 %s17, 1
        %p281 = scmp.lt.s32.totalorder %s26, 1
        %s282 = scalar_select %p281, %s26, 1
        %p283 = scmp.lt.s32.totalorder %s27, 1
        %s284 = scalar_select %p283, %s27, 1
        %s285 = smul.addr %s282, 2
        %s286 = sadd.s32 %s284, %s285
        %s287 = smul.addr %s286, 2
        %s288 = scalar_lea.vmem %s0, %s287
        %p289 = pneg %p57
        %p290 = pneg %p54
        %p291 = scmp.lt.s32.totalorder %s26, 1
        %s292 = scalar_select %p291, %s26, 1
        %p293 = scmp.lt.s32.totalorder %s27, 1
        %s294 = scalar_select %p293, %s27, 1
        %s295 = smul.addr %s292, 2
        %s296 = sadd.s32 %s294, %s295
        %s297 = smul.addr %s296, 2
        %s298 = scalar_lea.vmem %s1, %s297
        %p299 = pneg %p85
        %p300 = pneg %p82
        %p301 = pneg %p106
        %p302 = pneg %p103
        %p303 = pneg %p127
        %p304 = pneg %p124
        %p305 = pneg %p148
        %p306 = pneg %p145
        %p307 = pneg %p169
        %p308 = pneg %p166
        %p309 = pneg %p190
        %p310 = pneg %p187
        %p311 = pneg %p218
        %p312 = pneg %p215
        %s313 = sand.u32 %s205, 1
        %s314 = scalar_lea.sflag [#allocation4], %s313
        %s315 = sand.u32 %s205, 1
        %s316 = smul.addr %s315, 2
        %s317 = scalar_lea.vmem [#allocation3], %s316
        %p318 = scmp.lt.s32.totalorder %s26, 1
        %s319 = scalar_select %p318, %s26, 1
        %p320 = scmp.lt.s32.totalorder %s27, 1
        %s321 = scalar_select %p320, %s27, 1
        %s322 = smul.addr %s319, 2
        %s323 = sadd.s32 %s321, %s322
        %s324 = smul.addr %s323, 2
        %s325 = scalar_lea.vmem %s0, %s324
        %p326 = scmp.lt.s32.totalorder %s26, 1
        %s327 = scalar_select %p326, %s26, 1
        %p328 = scmp.lt.s32.totalorder %s27, 1
        %s329 = scalar_select %p328, %s27, 1
        %s330 = smul.addr %s327, 2
        %s331 = sadd.s32 %s329, %s330
        %s332 = smul.addr %s331, 2
        %s333 = scalar_lea.vmem %s1, %s332
        %v335 = vld [vmem:[%s325] sm:$0x3]
        %v336 = vld [vmem:[%s333] sm:$0x3]
        %v337 = vld [vmem:[%s2] sm:$0xf]
        %v338 = vld [vmem:[%s3] sm:$0xf]
        %vm339 = vcmask 31744
        %v341 = vsel %vm339, %v338, 0
        %vm343 = vcmask 1041408
        %v345 = vsel %vm343, %v336, 0
        %347 = vmatprep.subr.bf16.mxu0 0
        %348 = vmatpush1.bf16.msra.mxu0 %v345
        %349 = vmatprep.subr.bf16.mxu0 0
        %350 = vmatpush1.bf16.msra.mxu0 0
        %351 = vmatprep.subr.bf16.mxu0 0
        %352 = vmatpush1.bf16.msra.mxu0 0
        %353 = vmatprep.subr.bf16.mxu0 0
        %354 = vmatpush1.bf16.msra.mxu0 0
        %355 = vmatprep.subr.bf16.mxu0 0
        %356 = vmatpush1.bf16.msra.mxu0 0
        %357 = vmatprep.subr.bf16.mxu0 0
        %358 = vmatpush1.bf16.msra.mxu0 0
        %359 = vmatprep.subr.bf16.mxu0 0
        %360 = vmatpush1.bf16.msra.mxu0 0
        %361 = vmatprep.subr.bf16.mxu0 0
        %362 = vmatpush1.bf16.msra.mxu0 0
        %363 = vmatprep.subr.bf16.mxu0 0
        %364 = vmatpush1.bf16.msra.mxu0 0
        %365 = vmatprep.subr.bf16.mxu0 0
        %366 = vmatpush1.bf16.msra.mxu0 0
        %367 = vmatprep.subr.bf16.mxu0 0
        %368 = vmatpush1.bf16.msra.mxu0 0
        %369 = vmatprep.subr.bf16.mxu0 0
        %370 = vmatpush1.bf16.msra.mxu0 0
        %371 = vmatprep.subr.bf16.mxu0 0
        %372 = vmatpush1.bf16.msra.mxu0 0
        %373 = vmatprep.subr.bf16.mxu0 0
        %374 = vmatpush1.bf16.msra.mxu0 0
        %375 = vmatprep.subr.bf16.mxu0 0
        %376 = vmatpush1.bf16.msra.mxu0 0
        %377 = vmatprep.subr.bf16.mxu0 0
        %378 = vmatpush1.bf16.msra.mxu0 0
        %379 = vmatprep.mubr.bf16.mxu0 0
        %380 = vmatmul.mubr.bf16.gmra.mrb[0].mxu0 %v341
        %v381 = vpop.f32.mrb[0].mxu0
        %v382 = vadd.f32 0.0, %v381
        %v383 = vpop.f32.mrb[0].mxu0
        %v384 = vpop.f32.mrb[0].mxu0
        %v385 = vpop.f32.mrb[0].mxu0
        %386 = vdwg.mxu0
        %v388 = vsel %vm339, %v337, 0
        %v391 = vsel %vm343, %v335, 0
        %393 = vmatprep.subr.bf16.mxu0 0
        %394 = vmatpush1.bf16.msra.mxu0 %v391
        %395 = vmatprep.subr.bf16.mxu0 0
        %396 = vmatpush1.bf16.msra.mxu0 0
        %397 = vmatprep.subr.bf16.mxu0 0
        %398 = vmatpush1.bf16.msra.mxu0 0
        %399 = vmatprep.subr.bf16.mxu0 0
        %400 = vmatpush1.bf16.msra.mxu0 0
        %401 = vmatprep.subr.bf16.mxu0 0
        %402 = vmatpush1.bf16.msra.mxu0 0
        %403 = vmatprep.subr.bf16.mxu0 0
        %404 = vmatpush1.bf16.msra.mxu0 0
        %405 = vmatprep.subr.bf16.mxu0 0
        %406 = vmatpush1.bf16.msra.mxu0 0
        %407 = vmatprep.subr.bf16.mxu0 0
        %408 = vmatpush1.bf16.msra.mxu0 0
        %409 = vmatprep.subr.bf16.mxu0 0
        %410 = vmatpush1.bf16.msra.mxu0 0
        %411 = vmatprep.subr.bf16.mxu0 0
        %412 = vmatpush1.bf16.msra.mxu0 0
        %413 = vmatprep.subr.bf16.mxu0 0
        %414 = vmatpush1.bf16.msra.mxu0 0
        %415 = vmatprep.subr.bf16.mxu0 0
        %416 = vmatpush1.bf16.msra.mxu0 0
        %417 = vmatprep.subr.bf16.mxu0 0
        %418 = vmatpush1.bf16.msra.mxu0 0
        %419 = vmatprep.subr.bf16.mxu0 0
        %420 = vmatpush1.bf16.msra.mxu0 0
        %421 = vmatprep.subr.bf16.mxu0 0
        %422 = vmatpush1.bf16.msra.mxu0 0
        %423 = vmatprep.subr.bf16.mxu0 0
        %424 = vmatpush1.bf16.msra.mxu0 0
        %425 = vmatprep.mubr.bf16.mxu0 0
        %426 = vmatmul.mubr.bf16.gmra.mrb[0].mxu0 %v388
        %v427 = vpop.f32.mrb[0].mxu0
        %v428 = vadd.f32 %v382, %v427
        %v429 = vpop.f32.mrb[0].mxu0
        %v430 = vpop.f32.mrb[0].mxu0
        %v431 = vpop.f32.mrb[0].mxu0
        %432 = vdwg.mxu0
        %v433 = vld [vmem:[%s4] sm:$0xff]
        %435 = vset.pattern.permute.xlu0 0
        %436 = vperm.xlu0 %435, %v433
        %v437 = vpop.permute.xlu0 %436
        %v439 = vadd.f32 %v428, %v437
        %v440 = vmax.f32 %v439, 0.0
        %v441 = vld [vmem:[%s5] sm:$0x1]
        %s442 = sld [smem:[#allocation2]]
        %v443 = vstv %s442
        %vm444 = vcmask 64512
        %v446 = vsel %vm444, %v441, 0
        %448 = vmatprep.subr.mxu0 0.0
        %449 = vmatpush1.msra.mxu0 %v440
        %450 = vmatprep.subr.mxu0 0.0
        %451 = vmatpush1.msra.mxu0 0.0
        %452 = vmatprep.subr.mxu0 0.0
        %453 = vmatpush1.msra.mxu0 0.0
        %454 = vmatprep.subr.mxu0 0.0
        %455 = vmatpush1.msra.mxu0 0.0
        %456 = vmatprep.subr.mxu0 0.0
        %457 = vmatpush1.msra.mxu0 0.0
        %458 = vmatprep.subr.mxu0 0.0
        %459 = vmatpush1.msra.mxu0 0.0
        %460 = vmatprep.subr.mxu0 0.0
        %461 = vmatpush1.msra.mxu0 0.0
        %462 = vmatprep.subr.mxu0 0.0
        %463 = vmatpush1.msra.mxu0 0.0
        %464 = vmatprep.subr.mxu0 0.0
        %465 = vmatpush1.msra.mxu0 0.0
        %466 = vmatprep.subr.mxu0 0.0
        %467 = vmatpush1.msra.mxu0 0.0
        %468 = vmatprep.subr.mxu0 0.0
        %469 = vmatpush1.msra.mxu0 0.0
        %470 = vmatprep.subr.mxu0 0.0
        %471 = vmatpush1.msra.mxu0 0.0
        %472 = vmatprep.subr.mxu0 0.0
        %473 = vmatpush1.msra.mxu0 0.0
        %474 = vmatprep.subr.mxu0 0.0
        %475 = vmatpush1.msra.mxu0 0.0
        %476 = vmatprep.subr.mxu0 0.0
        %477 = vmatpush1.msra.mxu0 0.0
        %478 = vmatprep.subr.mxu0 0.0
        %479 = vmatpush1.msra.mxu0 0.0
        %480 = vmatprep.subr.mxu0 0.0
        %481 = vmatpush1.msra.mxu0 0.0
        %482 = vmatprep.subr.mxu0 0.0
        %483 = vmatpush1.msra.mxu0 0.0
        %484 = vmatprep.subr.mxu0 0.0
        %485 = vmatpush1.msra.mxu0 0.0
        %486 = vmatprep.subr.mxu0 0.0
        %487 = vmatpush1.msra.mxu0 0.0
        %488 = vmatprep.subr.mxu0 0.0
        %489 = vmatpush1.msra.mxu0 0.0
        %490 = vmatprep.subr.mxu0 0.0
        %491 = vmatpush1.msra.mxu0 0.0
        %492 = vmatprep.subr.mxu0 0.0
        %493 = vmatpush1.msra.mxu0 0.0
        %494 = vmatprep.subr.mxu0 0.0
        %495 = vmatpush1.msra.mxu0 0.0
        %496 = vmatprep.subr.mxu0 0.0
        %497 = vmatpush1.msra.mxu0 0.0
        %498 = vmatprep.subr.mxu0 0.0
        %499 = vmatpush1.msra.mxu0 0.0
        %500 = vmatprep.subr.mxu0 0.0
        %501 = vmatpush1.msra.mxu0 0.0
        %502 = vmatprep.subr.mxu0 0.0
        %503 = vmatpush1.msra.mxu0 0.0
        %504 = vmatprep.subr.mxu0 0.0
        %505 = vmatpush1.msra.mxu0 0.0
        %506 = vmatprep.subr.mxu0 0.0
        %507 = vmatpush1.msra.mxu0 0.0
        %508 = vmatprep.subr.mxu0 0.0
        %509 = vmatpush1.msra.mxu0 0.0
        %510 = vmatprep.subr.mxu0 0.0
        %511 = vmatpush1.msra.mxu0 0.0
        %512 = vmatprep.mubr.f32.mxu0 0.0
        %513 = vmatmul.mubr.f32.gmra.mrb[0].mxu0 %v446
        %v514 = vpop.f32.mrb[0].mxu0
        %v515 = vadd.f32 %v443, %v514
        %v516 = vpop.f32.mrb[0].mxu0
        %517 = vdwg.mxu0
        %v518 = vxor.u32 %v515, 2147483648
        %v519 = vmul.f32 %v518, 1.442695
        %v520 = vpow.pop %v519
        %v521 = vadd.f32 %v520, 1.0
        %v522 = vrcp.pop %v521
        %v523 = vmul.f32 1.0, %v522
        %v524 = vunpack.c.l.bf16 %v336
        %v525 = vlaneseq
        %v526 = vshrl.u32 %v525, 7
        %v527 = vsub.s32 0, %v526
        %v528 = vrot.slane %v523, %v527
        %v529 = vmul.f32 %v524, %v528
        %v530 = vpack.c.bf16 %v529, %v529
        %531 = vst [vmem:[%s317] sm:$0x3] %v530
        %s532 = sand.u32 %s205, 1
        %s533 = scalar_lea.sflag [#allocation4], %s532
        %s534 = sand.u32 %s205, 1
        %s535 = smul.addr %s534, 2
        %s536 = scalar_lea.vmem [#allocation3], %s535
        // Predicated region
        $region49: #{tpu_custom_call.1} parent=47 // pred_check
          %p537 = pneg %p215
        $region50: #{tpu_custom_call.1} parent=47 // pred_check_branch
          %539 = sbr.rel (%p537) target = $region52
        $region51: #{tpu_custom_call.1} parent=47 // pred_region
          %s541 = ssub.s32 32, 32
          %542 = vsyncadd %s533, %s541
          %s543 = smul.addr %s26, 2
          %s544 = sadd.s32 %s27, %s543
          %s545 = smul.addr %s544, 32
          %s546 = scalar_lea.hbm %s7, %s545
          %s548 = sshll.u32 %s536, 4
          %s549 = int_to_ptr.vmem [resolvable:$true] %s548
          %551 = dma.vmem_to_hbm [thread:$0]  %s549, 32, %s546, %s533
        $region52: #{tpu_custom_call.1} parent=47 // pred_fallthru
          _
      $region48: #{tpu_custom_call.1} parent=5 // pred_fallthru
        _
      %p552 = scmp.le.s32.totalorder 2, %s17
      // Predicated region
      $region53: #{tpu_custom_call.1} parent=5 // pred_check
        %p553 = pneg %p552
      $region54: #{tpu_custom_call.1} parent=5 // pred_check_branch
        %555 = sbr.rel (%p553) target = $region56
      $region55: #{tpu_custom_call.1} parent=5 // pred_region
        %s556 = ssub.s32 %s17, 2
        // Predicated region
        $region57: #{tpu_custom_call.1} parent=55 // pred_check
          %p557 = pneg %p221
        $region58: #{tpu_custom_call.1} parent=55 // pred_check_branch
          %559 = sbr.rel (%p557) target = $region60
        $region59: #{tpu_custom_call.1} parent=55 // pred_region
          %s560 = sand.u32 %s206, 1
          %s561 = scalar_lea.sflag [#allocation4], %s560
          %s562 = sand.u32 %s206, 1
          %s563 = smul.addr %s562, 2
          %s564 = scalar_lea.vmem [#allocation3], %s563
          %565 = dma.done %s561, 32
        $region60: #{tpu_custom_call.1} parent=55 // pred_fallthru
          _
      $region56: #{tpu_custom_call.1} parent=5 // pred_fallthru
        _
    $region6: #{tpu_custom_call.1} parent=1 // loop_footer
      %s21 = sadd.s32 1, %s17
    $region7: #{tpu_custom_call.1} parent=1 // loop_footer_branch
      %16 = sbr.rel target = $region3
    $region8: #{tpu_custom_call.1} parent=1 // loop_exit
      _
    %566 = vsyncpa [#allocation4], 1
    %s567 = scalar_lea.sflag [#allocation4], 1
    %568 = vsyncpa %s567, 1

</llo_original>
